<compile_context>
chip_gen: v5e
topology: v5e:2x2
jax: 0.10.0
libtpu: 0.0.40
codegen_flags: <defaults>
</compile_context>

<pallas_src>
import functools
import math

import jax
import jax.numpy as jnp
from jax.experimental import pallas as pl
from jax.experimental.pallas import tpu as pltpu

_HIGHEST = jax.lax.Precision.HIGHEST


# ----------------------------------------------------------------------------
# Kernels
# ----------------------------------------------------------------------------
def _layernorm_kernel(x_ref, alpha_ref, bias_ref, o_ref, *, eps, inv_d, inv_dm1):
    """Generic path: features on lanes (best when D is a multiple of 128)."""
    xf = x_ref[...].astype(jnp.float32)                        # (rows, D), one cast

    # Two-pass statistics (numerically safer than sum-of-squares).
    mean = jnp.sum(xf, axis=-1, keepdims=True) * inv_d         # (rows, 1)
    c = xf - mean
    var = jnp.sum(c * c, axis=-1, keepdims=True) * inv_dm1     # unbiased (N-1)
    denom = jnp.sqrt(jnp.maximum(var, 0.0)) + eps

    # EUP approximate reciprocal + one Newton step (~f32 accuracy); the
    # full-width op below is a multiply, not a divide.
    inv = pl.reciprocal(denom, approx=True)
    inv = inv * (2.0 - denom * inv)

    alpha = alpha_ref[...].astype(jnp.float32)                 # (1, D)
    bias = bias_ref[...].astype(jnp.float32)                   # (1, D)
    o_ref[...] = (c * inv * alpha + bias).astype(o_ref.dtype)


def _layernorm_packed_kernel(x_ref, alpha_ref, bias_ref, seg_ref, segt_ref,
                             o_ref, *, eps, inv_d, inv_dm1):
    """Lane-packed path: each block row holds k original rows (k segments of D).

    Segmented reductions / broadcasts are done with tiny one-hot matmuls on
    the MXU (idle in this HBM-bound kernel), at HIGHEST precision so f32
    accuracy is preserved.  All rows (packed or not) remain independent, so
    garbage rows in a padded partial block never contaminate valid rows.
    """
    xf = x_ref[...].astype(jnp.float32)                        # (rows, k*D), one cast
    seg = seg_ref[...]                                         # (k*D, k) one-hot f32
    segt = segt_ref[...]                                       # (k, k*D) one-hot f32

    ssum = jnp.dot(xf, seg, precision=_HIGHEST,
                   preferred_element_type=jnp.float32)         # (rows, k)
    mean = ssum * inv_d
    mean_full = jnp.dot(mean, segt, precision=_HIGHEST,
                        preferred_element_type=jnp.float32)    # (rows, k*D)

    c = xf - mean_full
    var = jnp.dot(c * c, seg, precision=_HIGHEST,
                  preferred_element_type=jnp.float32) * inv_dm1
    denom = jnp.sqrt(jnp.maximum(var, 0.0)) + eps              # (rows, k)

    inv = pl.reciprocal(denom, approx=True)
    inv = inv * (2.0 - denom * inv)
    inv_full = jnp.dot(inv, segt, precision=_HIGHEST,
                       preferred_element_type=jnp.float32)     # (rows, k*D)

    alpha = alpha_ref[...].astype(jnp.float32)                 # (1, k*D)
    bias = bias_ref[...].astype(jnp.float32)                   # (1, k*D)
    o_ref[...] = (c * inv_full * alpha + bias).astype(o_ref.dtype)


# ----------------------------------------------------------------------------
# Tiling / VMEM planning
# ----------------------------------------------------------------------------
def _vmem_plan():
    """Per-generation scoped-VMEM limit (bytes) with headroom for Mosaic scratch."""
    try:
        phys = int(pltpu.get_tpu_info().vmem_capacity_bytes)
    except Exception:
        phys = 64 << 20          # conservative fallback: v7x-class 64 MiB / TC
    # 64 MiB parts (v7x) -> 48 MiB; 128 MiB parts (v5e/v6e) -> 100 MiB.
    limit = min(phys - (16 << 20), 100 << 20)
    return int(max(limit, 32 << 20))


def _sanitize_rows_block(rows, n_rows):
    rows = max(1, min(int(rows), n_rows))
    if rows >= n_rows:
        return n_rows
    rows = max(8, (rows // 8) * 8)             # sublane-aligned blocks
    return n_rows if rows >= n_rows else rows


def _choose_rows_block(n_rows, row_width, dtype_bytes, vmem_limit, min_grid_steps=4):
    """Largest row tile fitting ~3/4 of the VMEM plan, with >= min_grid_steps blocks."""
    # 2 x (in + out) double buffers + ~4 row-wide f32 temporaries per grid step.
    per_row = 4 * row_width * dtype_bytes + 4 * row_width * 4
    rows = max(1, (vmem_limit * 3 // 4) // per_row)
    # Keep several grid steps so dual-TensorCore chips (v7x) shard the rows;
    # no-op for large inputs (tiles stay multi-MiB).
    rows = min(rows, -(-n_rows // min_grid_steps))
    return _sanitize_rows_block(rows, n_rows)


def _call_layernorm(kernel, inputs, in_specs, n_rows, width, rb, dtype, vmem_limit):
    grid = (pl.cdiv(n_rows, rb),)              # partial last block handled by Pallas
    return pl.pallas_call(
        kernel,
        out_shape=jax.ShapeDtypeStruct((n_rows, width), dtype),
        grid_spec=pltpu.PrefetchScalarGridSpec(
            num_scalar_prefetch=0,
            grid=grid,
            in_specs=in_specs,
            out_specs=pl.BlockSpec((rb, width), lambda i: (i, 0)),
        ),
        compiler_params=pltpu.CompilerParams(
            dimension_semantics=("parallel",),
            vmem_limit_bytes=vmem_limit,
        ),
    )(*inputs)


# ----------------------------------------------------------------------------
# Public wrapper
# ----------------------------------------------------------------------------
def layer_normalization(x, alpha, bias, eps=1e-6, rows_block=None):
    """x: (..., D); alpha, bias: (D,). Returns same shape/dtype as x."""
    orig_shape = x.shape
    D = orig_shape[-1]
    R = int(math.prod(orig_shape[:-1]))
    dtype_bytes = jnp.dtype(x.dtype).itemsize
    vmem_limit = _vmem_plan()

    inv_d = 1.0 / D
    # torch.std of a single element is NaN (N-1 == 0); keep that behavior.
    inv_dm1 = (1.0 / (D - 1)) if D > 1 else float("nan")

    # Lane-dense packing factor for narrow feature dims.
    k = 128 // D if (0 < D < 128 and 128 % D == 0) else 1
    while k > 1 and R % k != 0:
        k //= 2
    if k > 1 and R // k < 8:
        k = 1                                   # too few rows to pack usefully

    if k > 1:
        W, Rp = k * D, R // k
        x2 = x.reshape(Rp, W)                   # free metadata reshape, no HBM copy
        alpha2 = jnp.tile(alpha.reshape(1, D), (1, k))
        bias2 = jnp.tile(bias.reshape(1, D), (1, k))
        # One-hot segment matrices for the in-kernel segmented reduce/broadcast.
        seg_of_lane = jnp.arange(W, dtype=jnp.int32) // D
        groups = jnp.arange(k, dtype=jnp.int32)
        seg = (seg_of_lane[:, None] == groups[None, :]).astype(jnp.float32)   # (W, k)
        segt = (groups[:, None] == seg_of_lane[None, :]).astype(jnp.float32)  # (k, W)

        rb = (_choose_rows_block(Rp, W, dtype_bytes, vmem_limit)
              if rows_block is None else _sanitize_rows_block(rows_block, Rp))
        kernel = functools.partial(_layernorm_packed_kernel, eps=eps,
                                   inv_d=inv_d, inv_dm1=inv_dm1)
        in_specs = [
            pl.BlockSpec((rb, W), lambda i: (i, 0)),
            # Params / segment matrices: constant index maps -> fetched once,
            # resident across the whole grid (no per-step re-DMA).
            pl.BlockSpec((1, W), lambda i: (0, 0)),
            pl.BlockSpec((1, W), lambda i: (0, 0)),
            pl.BlockSpec((W, k), lambda i: (0, 0)),
            pl.BlockSpec((k, W), lambda i: (0, 0)),
        ]
        out = _call_layernorm(kernel, (x2, alpha2, bias2, seg, segt),
                              in_specs, Rp, W, rb, x.dtype, vmem_limit)
        return out.reshape(orig_shape)

    # Generic path: D already lane-dense (>= 128) or packing not applicable.
    x2 = x.reshape(R, D)
    alpha2 = alpha.reshape(1, D)
    bias2 = bias.reshape(1, D)
    rb = (_choose_rows_block(R, D, dtype_bytes, vmem_limit)
          if rows_block is None else _sanitize_rows_block(rows_block, R))
    kernel = functools.partial(_layernorm_kernel, eps=eps,
                               inv_d=inv_d, inv_dm1=inv_dm1)
    in_specs = [
        pl.BlockSpec((rb, D), lambda i: (i, 0)),
        pl.BlockSpec((1, D), lambda i: (0, 0)),
        pl.BlockSpec((1, D), lambda i: (0, 0)),
    ]
    out = _call_layernorm(kernel, (x2, alpha2, bias2), in_specs, R, D, rb,
                          x.dtype, vmem_limit)
    return out.reshape(orig_shape)


# ----------------------------------------------------------------------------
# Demo / self-check
# ----------------------------------------------------------------------------
if __name__ == "__main__":
    key = jax.random.PRNGKey(0)
    k1, k2 = jax.random.split(key)

    def _ref(x, alpha, bias, eps=1e-6):
        d = x.shape[-1]
        mean = jnp.mean(x, axis=-1, keepdims=True)
        std = jnp.sqrt(jnp.sum((x - mean) ** 2, axis=-1, keepdims=True) / (d - 1))
        return alpha * (x - mean) / (std + eps) + bias

    # 1) Narrow feature dim -> exercises the lane-packed path (k = 128 // 32 = 4).
    B, S, D = 2, 16, 32
    x = jax.random.normal(k1, (B, S, D), dtype=jnp.float32)
    alpha = jnp.ones((D,), dtype=jnp.float32)   # nn.Parameter(torch.ones(features))
    bias = jnp.zeros((D,), dtype=jnp.float32)   # nn.Parameter(torch.zeros(features))
    y = jax.block_until_ready(layer_normalization(x, alpha, bias, eps=1e-6))
    assert jnp.allclose(y, _ref(x, alpha, bias), atol=1e-4, rtol=1e-4), \
        "packed-path mismatch vs reference"

    # 2) Lane-dense feature dim -> exercises the generic path.
    D2 = 128
    x2 = jax.random.normal(k2, (4, 8, D2), dtype=jnp.float32)
    a2 = jnp.ones((D2,), dtype=jnp.float32)
    b2 = jnp.zeros((D2,), dtype=jnp.float32)
    y2 = jax.block_until_ready(layer_normalization(x2, a2, b2, eps=1e-6))
    assert jnp.allclose(y2, _ref(x2, a2, b2), atol=1e-4, rtol=1e-4), \
        "generic-path mismatch vs reference"

    print("KERNEL_OK")
</pallas_src>

<mosaic_0001>
module attributes {stable_mosaic.version = 11 : i64} {
  func.func @_layernorm_packed_kernel(%arg0: i32, %arg1: memref<8x128xf32, #tpu.memory_space<vmem>>, %arg2: memref<1x128xf32, #tpu.memory_space<vmem>>, %arg3: memref<1x128xf32, #tpu.memory_space<vmem>>, %arg4: memref<128x4xf32, #tpu.memory_space<vmem>>, %arg5: memref<4x128xf32, #tpu.memory_space<vmem>>, %arg6: memref<8x128xf32, #tpu.memory_space<vmem>>) attributes {dimension_semantics = [#tpu.dimension_semantics<parallel>], iteration_bounds = array<i64: 1>, scalar_prefetch = 0 : i64, scratch_operands = 0 : i64, tpu.core_type = #tpu.core_type<tc>, window_params = [{transform_indices = @transform_0, window_bounds = array<i64: 8, 128>}, {pipeline_mode = #tpu.pipeline_mode<synchronous>, transform_indices = @transform_1, window_bounds = array<i64: 1, 128>}, {pipeline_mode = #tpu.pipeline_mode<synchronous>, transform_indices = @transform_2, window_bounds = array<i64: 1, 128>}, {pipeline_mode = #tpu.pipeline_mode<synchronous>, transform_indices = @transform_3, window_bounds = array<i64: 128, 4>}, {pipeline_mode = #tpu.pipeline_mode<synchronous>, transform_indices = @transform_4, window_bounds = array<i64: 4, 128>}, {transform_indices = @transform_5, window_bounds = array<i64: 8, 128>}]} {
    %c0 = arith.constant 0 : index
    %c0_0 = arith.constant 0 : index
    %0 = vector.load %arg1[%c0, %c0_0] : memref<8x128xf32, #tpu.memory_space<vmem>>, vector<8x128xf32>
    %c0_1 = arith.constant 0 : index
    %c0_2 = arith.constant 0 : index
    %1 = vector.load %arg4[%c0_1, %c0_2] : memref<128x4xf32, #tpu.memory_space<vmem>>, vector<128x4xf32>
    %c0_3 = arith.constant 0 : index
    %c0_4 = arith.constant 0 : index
    %2 = vector.load %arg5[%c0_3, %c0_4] : memref<4x128xf32, #tpu.memory_space<vmem>>, vector<4x128xf32>
    %cst = arith.constant dense<0.000000e+00> : vector<8x4xf32>
    %3 = tpu.matmul %0, %1, %cst {dimension_numbers = #tpu.dot_dimension_numbers<[1], [0], [0], [1], [0, 0, 1, 1], [], []>, precision = #tpu.contract_precision<fp32>} : vector<8x128xf32>, vector<128x4xf32>, vector<8x4xf32> -> vector<8x4xf32>
    %cst_5 = arith.constant 3.125000e-02 : f32
    %4 = vector.broadcast %cst_5 : f32 to vector<8x4xf32>
    %5 = arith.mulf %3, %4 : vector<8x4xf32>
    %cst_6 = arith.constant dense<0.000000e+00> : vector<8x128xf32>
    %6 = tpu.matmul %5, %2, %cst_6 {dimension_numbers = #tpu.dot_dimension_numbers<[1], [0], [0], [1], [0, 0, 1, 1], [], []>, precision = #tpu.contract_precision<fp32>} : vector<8x4xf32>, vector<4x128xf32>, vector<8x128xf32> -> vector<8x128xf32>
    %7 = arith.subf %0, %6 : vector<8x128xf32>
    %8 = arith.mulf %7, %7 : vector<8x128xf32>
    %cst_7 = arith.constant dense<0.000000e+00> : vector<8x4xf32>
    %9 = tpu.matmul %8, %1, %cst_7 {dimension_numbers = #tpu.dot_dimension_numbers<[1], [0], [0], [1], [0, 0, 1, 1], [], []>, precision = #tpu.contract_precision<fp32>} : vector<8x128xf32>, vector<128x4xf32>, vector<8x4xf32> -> vector<8x4xf32>
    %cst_8 = arith.constant 0.0322580636 : f32
    %10 = vector.broadcast %cst_8 : f32 to vector<8x4xf32>
    %11 = arith.mulf %9, %10 : vector<8x4xf32>
    %cst_9 = arith.constant 0.000000e+00 : f32
    %12 = vector.broadcast %cst_9 : f32 to vector<8x4xf32>
    %13 = arith.maximumf %11, %12 : vector<8x4xf32>
    %14 = math.sqrt %13 : vector<8x4xf32>
    %cst_10 = arith.constant 9.99999997E-7 : f32
    %15 = vector.broadcast %cst_10 : f32 to vector<8x4xf32>
    %16 = arith.addf %14, %15 : vector<8x4xf32>
    %17 = tpu.reciprocal %16 {approx = true} : vector<8x4xf32> -> vector<8x4xf32>
    %18 = arith.mulf %16, %17 : vector<8x4xf32>
    %cst_11 = arith.constant 2.000000e+00 : f32
    %19 = vector.broadcast %cst_11 : f32 to vector<8x4xf32>
    %20 = arith.subf %19, %18 : vector<8x4xf32>
    %21 = arith.mulf %17, %20 : vector<8x4xf32>
    %cst_12 = arith.constant dense<0.000000e+00> : vector<8x128xf32>
    %22 = tpu.matmul %21, %2, %cst_12 {dimension_numbers = #tpu.dot_dimension_numbers<[1], [0], [0], [1], [0, 0, 1, 1], [], []>, precision = #tpu.contract_precision<fp32>} : vector<8x4xf32>, vector<4x128xf32>, vector<8x128xf32> -> vector<8x128xf32>
    %c0_13 = arith.constant 0 : index
    %c0_14 = arith.constant 0 : index
    %23 = vector.load %arg2[%c0_13, %c0_14] : memref<1x128xf32, #tpu.memory_space<vmem>>, vector<1x128xf32>
    %c0_15 = arith.constant 0 : index
    %c0_16 = arith.constant 0 : index
    %24 = vector.load %arg3[%c0_15, %c0_16] : memref<1x128xf32, #tpu.memory_space<vmem>>, vector<1x128xf32>
    %25 = arith.mulf %7, %22 : vector<8x128xf32>
    %26 = vector.broadcast %23 : vector<1x128xf32> to vector<8x128xf32>
    %27 = arith.mulf %25, %26 : vector<8x128xf32>
    %28 = vector.broadcast %24 : vector<1x128xf32> to vector<8x128xf32>
    %29 = arith.addf %27, %28 : vector<8x128xf32>
    %c0_17 = arith.constant 0 : index
    %c0_18 = arith.constant 0 : index
    %30 = vector.load %arg6[%c0_17, %c0_18] : memref<8x128xf32, #tpu.memory_space<vmem>>, vector<8x128xf32>
    tpu.vector_store %arg6[%c0_17, %c0_18], %29 {strides = array<i32>} : memref<8x128xf32, #tpu.memory_space<vmem>>, vector<8x128xf32>,
    return
  }
  func.func @transform_0(%arg0: i32) -> (i32, i32) {
    %c0_i32 = arith.constant 0 : i32
    %c0_i32_0 = arith.constant 0 : i32
    return %arg0, %c0_i32 : i32, i32
  }
  func.func @transform_1(%arg0: i32) -> (i32, i32) {
    %c0_i32 = arith.constant 0 : i32
    %c0_i32_0 = arith.constant 0 : i32
    %c0_i32_1 = arith.constant 0 : i32
    return %c0_i32, %c0_i32_0 : i32, i32
  }
  func.func @transform_2(%arg0: i32) -> (i32, i32) {
    %c0_i32 = arith.constant 0 : i32
    %c0_i32_0 = arith.constant 0 : i32
    %c0_i32_1 = arith.constant 0 : i32
    return %c0_i32, %c0_i32_0 : i32, i32
  }
  func.func @transform_3(%arg0: i32) -> (i32, i32) {
    %c0_i32 = arith.constant 0 : i32
    %c0_i32_0 = arith.constant 0 : i32
    %c0_i32_1 = arith.constant 0 : i32
    return %c0_i32, %c0_i32_0 : i32, i32
  }
  func.func @transform_4(%arg0: i32) -> (i32, i32) {
    %c0_i32 = arith.constant 0 : i32
    %c0_i32_0 = arith.constant 0 : i32
    %c0_i32_1 = arith.constant 0 : i32
    return %c0_i32, %c0_i32_0 : i32, i32
  }
  func.func @transform_5(%arg0: i32) -> (i32, i32) {
    %c0_i32 = arith.constant 0 : i32
    %c0_i32_0 = arith.constant 0 : i32
    return %arg0, %c0_i32 : i32, i32
  }
}

</mosaic_0001>

<llo_original>
// kernel: tpu_custom_call.1
$region0: #{tpu_custom_call.1}
  #allocation0 [shape = 'u32[]', space=smem, size = 0x4, offset = 0x4, fixed_abs, tag = 'smem constant byte address 0x4 - core index']
  #allocation1 [shape = 'u32[72,128]{1,0:T(1,128)}', space=vmem, size = 0x9000, scoped, tag = 'internal scratch']
  %s0 = inlined_call_operand.vmem [shape: f32[8,128], index: 0, kind: input, shape index: {}]
  %s1 = inlined_call_operand.vmem [shape: f32[1,128], index: 1, kind: input, shape index: {}]
  %s2 = inlined_call_operand.vmem [shape: f32[1,128], index: 2, kind: input, shape index: {}]
  %s3 = inlined_call_operand.vmem [shape: f32[128,4], index: 3, kind: input, shape index: {}]
  %s4 = inlined_call_operand.vmem [shape: f32[4,128], index: 4, kind: input, shape index: {}]
  %s5 = inlined_call_operand.hbm [shape: f32[8,128], index: 5, kind: output, shape index: {}]
  %s6 = sld [smem:[#allocation0]]
  $region30: #{tpu_custom_call.1} parent=0
    _
  %s8 = ssub.s32 1, %s6
  %s9 = scalar_select 0, %s8, %s6
  $region1: #{tpu_custom_call.1} parent=0
    #allocation2 [shape = 'u8[4096]{0}', space=vmem, size = 0x1000, scoped, tag = 'output window, operand 0, single buffered']
    #allocation3 [shape = 's32[1]{0}', space=sflag, size = 0x4, scoped, tag = 'scoped memory for tpu_custom_call.1']
    %10 = vsyncpa [#allocation3], 0
    // Predicated region
    $region2: #{tpu_custom_call.1} parent=1 // pred_check
      _
    $region3: #{tpu_custom_call.1} parent=1 // pred_check_branch
      %12 = sbr.rel (0) target = $region5
    $region4: #{tpu_custom_call.1} parent=1 // pred_region
      _
    $region5: #{tpu_custom_call.1} parent=1 // pred_fallthru
      _
    // Predicated region
    $region6: #{tpu_custom_call.1} parent=1 // pred_check
      _
    $region7: #{tpu_custom_call.1} parent=1 // pred_check_branch
      %14 = sbr.rel (0) target = $region9
    $region8: #{tpu_custom_call.1} parent=1 // pred_region
      _
    $region9: #{tpu_custom_call.1} parent=1 // pred_fallthru
      _
    // Predicated region
    $region10: #{tpu_custom_call.1} parent=1 // pred_check
      _
    $region11: #{tpu_custom_call.1} parent=1 // pred_check_branch
      %16 = sbr.rel (0) target = $region13
    $region12: #{tpu_custom_call.1} parent=1 // pred_region
      _
    $region13: #{tpu_custom_call.1} parent=1 // pred_fallthru
      _
    // Predicated region
    $region14: #{tpu_custom_call.1} parent=1 // pred_check
      _
    $region15: #{tpu_custom_call.1} parent=1 // pred_check_branch
      %18 = sbr.rel (0) target = $region17
    $region16: #{tpu_custom_call.1} parent=1 // pred_region
      _
    $region17: #{tpu_custom_call.1} parent=1 // pred_fallthru
      _
    // Predicated region
    $region18: #{tpu_custom_call.1} parent=1 // pred_check
      _
    $region19: #{tpu_custom_call.1} parent=1 // pred_check_branch
      %20 = sbr.rel (0) target = $region21
    $region20: #{tpu_custom_call.1} parent=1 // pred_region
      _
    $region21: #{tpu_custom_call.1} parent=1 // pred_fallthru
      _
    %v21 = vld [vmem:[%s0] sm:$0xff]
    %v22 = vld [vmem:[%s3] sm:$0xff]
    %v23 = vld [vmem:[%s3 + $0x8] sm:$0xff]
    %v24 = vld [vmem:[%s3 + $0x10] sm:$0xff]
    %v25 = vld [vmem:[%s3 + $0x18] sm:$0xff]
    %v26 = vld [vmem:[%s3 + $0x20] sm:$0xff]
    %v27 = vld [vmem:[%s3 + $0x28] sm:$0xff]
    %v28 = vld [vmem:[%s3 + $0x30] sm:$0xff]
    %v29 = vld [vmem:[%s3 + $0x38] sm:$0xff]
    %v30 = vld [vmem:[%s3 + $0x40] sm:$0xff]
    %v31 = vld [vmem:[%s3 + $0x48] sm:$0xff]
    %v32 = vld [vmem:[%s3 + $0x50] sm:$0xff]
    %v33 = vld [vmem:[%s3 + $0x58] sm:$0xff]
    %v34 = vld [vmem:[%s3 + $0x60] sm:$0xff]
    %v35 = vld [vmem:[%s3 + $0x68] sm:$0xff]
    %v36 = vld [vmem:[%s3 + $0x70] sm:$0xff]
    %v37 = vld [vmem:[%s3 + $0x78] sm:$0xff]
    %v38 = vld [vmem:[%s4] sm:$0xf]
    %v39 = vand.u32 %v37, 4294901760
    %40 = vmatpush.msra.mxu0 %v39
    %v41 = vand.u32 %v36, 4294901760
    %42 = vmatpush.msra.mxu0 %v41
    %v43 = vand.u32 %v35, 4294901760
    %44 = vmatpush.msra.mxu0 %v43
    %v45 = vand.u32 %v34, 4294901760
    %46 = vmatpush.msra.mxu0 %v45
    %v47 = vand.u32 %v33, 4294901760
    %48 = vmatpush.msra.mxu0 %v47
    %v49 = vand.u32 %v32, 4294901760
    %50 = vmatpush.msra.mxu0 %v49
    %v51 = vand.u32 %v31, 4294901760
    %52 = vmatpush.msra.mxu0 %v51
    %v53 = vand.u32 %v30, 4294901760
    %54 = vmatpush.msra.mxu0 %v53
    %v55 = vand.u32 %v29, 4294901760
    %56 = vmatpush.msra.mxu0 %v55
    %v57 = vand.u32 %v28, 4294901760
    %58 = vmatpush.msra.mxu0 %v57
    %v59 = vand.u32 %v27, 4294901760
    %60 = vmatpush.msra.mxu0 %v59
    %v61 = vand.u32 %v26, 4294901760
    %62 = vmatpush.msra.mxu0 %v61
    %v63 = vand.u32 %v25, 4294901760
    %64 = vmatpush.msra.mxu0 %v63
    %v65 = vand.u32 %v24, 4294901760
    %66 = vmatpush.msra.mxu0 %v65
    %v67 = vand.u32 %v23, 4294901760
    %68 = vmatpush.msra.mxu0 %v67
    %v69 = vand.u32 %v22, 4294901760
    %70 = vmatpush.msra.mxu0 %v69
    %v71 = vand.u32 %v21, 4294901760
    %v72 = vsub.f32 %v21, %v71
    %v73 = vand.u32 %v72, 4294901760
    %v74 = vsub.f32 %v72, %v73
    %v75 = vand.u32 %v74, 4294901760
    %76 = vmatmul.f32.gmra.mxu0 %v75
    %v77 = vpop.f32.mrf.mxu0
    %v78 = vadd.f32 0.0, %v77
    %79 = vdwg.mxu0
    %v80 = vand.u32 %v37, 4294901760
    %v81 = vsub.f32 %v37, %v80
    %v82 = vand.u32 %v81, 4294901760
    %v83 = vsub.f32 %v81, %v82
    %v84 = vand.u32 %v83, 4294901760
    %85 = vmatpush.msra.mxu0 %v84
    %v86 = vand.u32 %v36, 4294901760
    %v87 = vsub.f32 %v36, %v86
    %v88 = vand.u32 %v87, 4294901760
    %v89 = vsub.f32 %v87, %v88
    %v90 = vand.u32 %v89, 4294901760
    %91 = vmatpush.msra.mxu0 %v90
    %v92 = vand.u32 %v35, 4294901760
    %v93 = vsub.f32 %v35, %v92
    %v94 = vand.u32 %v93, 4294901760
    %v95 = vsub.f32 %v93, %v94
    %v96 = vand.u32 %v95, 4294901760
    %97 = vmatpush.msra.mxu0 %v96
    %v98 = vand.u32 %v34, 4294901760
    %v99 = vsub.f32 %v34, %v98
    %v100 = vand.u32 %v99, 4294901760
    %v101 = vsub.f32 %v99, %v100
    %v102 = vand.u32 %v101, 4294901760
    %103 = vmatpush.msra.mxu0 %v102
    %v104 = vand.u32 %v33, 4294901760
    %v105 = vsub.f32 %v33, %v104
    %v106 = vand.u32 %v105, 4294901760
    %v107 = vsub.f32 %v105, %v106
    %v108 = vand.u32 %v107, 4294901760
    %109 = vmatpush.msra.mxu0 %v108
    %v110 = vand.u32 %v32, 4294901760
    %v111 = vsub.f32 %v32, %v110
    %v112 = vand.u32 %v111, 4294901760
    %v113 = vsub.f32 %v111, %v112
    %v114 = vand.u32 %v113, 4294901760
    %115 = vmatpush.msra.mxu0 %v114
    %v116 = vand.u32 %v31, 4294901760
    %v117 = vsub.f32 %v31, %v116
    %v118 = vand.u32 %v117, 4294901760
    %v119 = vsub.f32 %v117, %v118
    %v120 = vand.u32 %v119, 4294901760
    %121 = vmatpush.msra.mxu0 %v120
    %v122 = vand.u32 %v30, 4294901760
    %v123 = vsub.f32 %v30, %v122
    %v124 = vand.u32 %v123, 4294901760
    %v125 = vsub.f32 %v123, %v124
    %v126 = vand.u32 %v125, 4294901760
    %127 = vmatpush.msra.mxu0 %v126
    %v128 = vand.u32 %v29, 4294901760
    %v129 = vsub.f32 %v29, %v128
    %v130 = vand.u32 %v129, 4294901760
    %v131 = vsub.f32 %v129, %v130
    %v132 = vand.u32 %v131, 4294901760
    %133 = vmatpush.msra.mxu0 %v132
    %v134 = vand.u32 %v28, 4294901760
    %v135 = vsub.f32 %v28, %v134
    %v136 = vand.u32 %v135, 4294901760
    %v137 = vsub.f32 %v135, %v136
    %v138 = vand.u32 %v137, 4294901760
    %139 = vmatpush.msra.mxu0 %v138
    %v140 = vand.u32 %v27, 4294901760
    %v141 = vsub.f32 %v27, %v140
    %v142 = vand.u32 %v141, 4294901760
    %v143 = vsub.f32 %v141, %v142
    %v144 = vand.u32 %v143, 4294901760
    %145 = vmatpush.msra.mxu0 %v144
    %v146 = vand.u32 %v26, 4294901760
    %v147 = vsub.f32 %v26, %v146
    %v148 = vand.u32 %v147, 4294901760
    %v149 = vsub.f32 %v147, %v148
    %v150 = vand.u32 %v149, 4294901760
    %151 = vmatpush.msra.mxu0 %v150
    %v152 = vand.u32 %v25, 4294901760
    %v153 = vsub.f32 %v25, %v152
    %v154 = vand.u32 %v153, 4294901760
    %v155 = vsub.f32 %v153, %v154
    %v156 = vand.u32 %v155, 4294901760
    %157 = vmatpush.msra.mxu0 %v156
    %v158 = vand.u32 %v24, 4294901760
    %v159 = vsub.f32 %v24, %v158
    %v160 = vand.u32 %v159, 4294901760
    %v161 = vsub.f32 %v159, %v160
    %v162 = vand.u32 %v161, 4294901760
    %163 = vmatpush.msra.mxu0 %v162
    %v164 = vand.u32 %v23, 4294901760
    %v165 = vsub.f32 %v23, %v164
    %v166 = vand.u32 %v165, 4294901760
    %v167 = vsub.f32 %v165, %v166
    %v168 = vand.u32 %v167, 4294901760
    %169 = vmatpush.msra.mxu0 %v168
    %v170 = vand.u32 %v22, 4294901760
    %v171 = vsub.f32 %v22, %v170
    %v172 = vand.u32 %v171, 4294901760
    %v173 = vsub.f32 %v171, %v172
    %v174 = vand.u32 %v173, 4294901760
    %175 = vmatpush.msra.mxu0 %v174
    %v176 = vand.u32 %v21, 4294901760
    %177 = vmatmul.f32.gmra.mxu0 %v176
    %v178 = vpop.f32.mrf.mxu0
    %v179 = vadd.f32 %v78, %v178
    %180 = vdwg.mxu0
    %v181 = vand.u32 %v37, 4294901760
    %v182 = vsub.f32 %v37, %v181
    %183 = vmatpush.msra.mxu0 %v182
    %v184 = vand.u32 %v36, 4294901760
    %v185 = vsub.f32 %v36, %v184
    %186 = vmatpush.msra.mxu0 %v185
    %v187 = vand.u32 %v35, 4294901760
    %v188 = vsub.f32 %v35, %v187
    %189 = vmatpush.msra.mxu0 %v188
    %v190 = vand.u32 %v34, 4294901760
    %v191 = vsub.f32 %v34, %v190
    %192 = vmatpush.msra.mxu0 %v191
    %v193 = vand.u32 %v33, 4294901760
    %v194 = vsub.f32 %v33, %v193
    %195 = vmatpush.msra.mxu0 %v194
    %v196 = vand.u32 %v32, 4294901760
    %v197 = vsub.f32 %v32, %v196
    %198 = vmatpush.msra.mxu0 %v197
    %v199 = vand.u32 %v31, 4294901760
    %v200 = vsub.f32 %v31, %v199
    %201 = vmatpush.msra.mxu0 %v200
    %v202 = vand.u32 %v30, 4294901760
    %v203 = vsub.f32 %v30, %v202
    %204 = vmatpush.msra.mxu0 %v203
    %v205 = vand.u32 %v29, 4294901760
    %v206 = vsub.f32 %v29, %v205
    %207 = vmatpush.msra.mxu0 %v206
    %v208 = vand.u32 %v28, 4294901760
    %v209 = vsub.f32 %v28, %v208
    %210 = vmatpush.msra.mxu0 %v209
    %v211 = vand.u32 %v27, 4294901760
    %v212 = vsub.f32 %v27, %v211
    %213 = vmatpush.msra.mxu0 %v212
    %v214 = vand.u32 %v26, 4294901760
    %v215 = vsub.f32 %v26, %v214
    %216 = vmatpush.msra.mxu0 %v215
    %v217 = vand.u32 %v25, 4294901760
    %v218 = vsub.f32 %v25, %v217
    %219 = vmatpush.msra.mxu0 %v218
    %v220 = vand.u32 %v24, 4294901760
    %v221 = vsub.f32 %v24, %v220
    %222 = vmatpush.msra.mxu0 %v221
    %v223 = vand.u32 %v23, 4294901760
    %v224 = vsub.f32 %v23, %v223
    %225 = vmatpush.msra.mxu0 %v224
    %v226 = vand.u32 %v22, 4294901760
    %v227 = vsub.f32 %v22, %v226
    %228 = vmatpush.msra.mxu0 %v227
    %v229 = vand.u32 %v21, 4294901760
    %v230 = vsub.f32 %v21, %v229
    %231 = vmatmul.f32.gmra.mxu0 %v230
    %v232 = vpop.f32.mrf.mxu0
    %v233 = vadd.f32 %v179, %v232
    %234 = vdwg.mxu0
    %v235 = vand.u32 %v37, 4294901760
    %236 = vmatpush.msra.mxu0 %v235
    %v237 = vand.u32 %v36, 4294901760
    %238 = vmatpush.msra.mxu0 %v237
    %v239 = vand.u32 %v35, 4294901760
    %240 = vmatpush.msra.mxu0 %v239
    %v241 = vand.u32 %v34, 4294901760
    %242 = vmatpush.msra.mxu0 %v241
    %v243 = vand.u32 %v33, 4294901760
    %244 = vmatpush.msra.mxu0 %v243
    %v245 = vand.u32 %v32, 4294901760
    %246 = vmatpush.msra.mxu0 %v245
    %v247 = vand.u32 %v31, 4294901760
    %248 = vmatpush.msra.mxu0 %v247
    %v249 = vand.u32 %v30, 4294901760
    %250 = vmatpush.msra.mxu0 %v249
    %v251 = vand.u32 %v29, 4294901760
    %252 = vmatpush.msra.mxu0 %v251
    %v253 = vand.u32 %v28, 4294901760
    %254 = vmatpush.msra.mxu0 %v253
    %v255 = vand.u32 %v27, 4294901760
    %256 = vmatpush.msra.mxu0 %v255
    %v257 = vand.u32 %v26, 4294901760
    %258 = vmatpush.msra.mxu0 %v257
    %v259 = vand.u32 %v25, 4294901760
    %260 = vmatpush.msra.mxu0 %v259
    %v261 = vand.u32 %v24, 4294901760
    %262 = vmatpush.msra.mxu0 %v261
    %v263 = vand.u32 %v23, 4294901760
    %264 = vmatpush.msra.mxu0 %v263
    %v265 = vand.u32 %v22, 4294901760
    %266 = vmatpush.msra.mxu0 %v265
    %v267 = vand.u32 %v21, 4294901760
    %v268 = vsub.f32 %v21, %v267
    %v269 = vand.u32 %v268, 4294901760
    %270 = vmatmul.f32.gmra.mxu0 %v269
    %v271 = vpop.f32.mrf.mxu0
    %v272 = vadd.f32 %v233, %v271
    %273 = vdwg.mxu0
    %v274 = vand.u32 %v37, 4294901760
    %v275 = vsub.f32 %v37, %v274
    %v276 = vand.u32 %v275, 4294901760
    %277 = vmatpush.msra.mxu0 %v276
    %v278 = vand.u32 %v36, 4294901760
    %v279 = vsub.f32 %v36, %v278
    %v280 = vand.u32 %v279, 4294901760
    %281 = vmatpush.msra.mxu0 %v280
    %v282 = vand.u32 %v35, 4294901760
    %v283 = vsub.f32 %v35, %v282
    %v284 = vand.u32 %v283, 4294901760
    %285 = vmatpush.msra.mxu0 %v284
    %v286 = vand.u32 %v34, 4294901760
    %v287 = vsub.f32 %v34, %v286
    %v288 = vand.u32 %v287, 4294901760
    %289 = vmatpush.msra.mxu0 %v288
    %v290 = vand.u32 %v33, 4294901760
    %v291 = vsub.f32 %v33, %v290
    %v292 = vand.u32 %v291, 4294901760
    %293 = vmatpush.msra.mxu0 %v292
    %v294 = vand.u32 %v32, 4294901760
    %v295 = vsub.f32 %v32, %v294
    %v296 = vand.u32 %v295, 4294901760
    %297 = vmatpush.msra.mxu0 %v296
    %v298 = vand.u32 %v31, 4294901760
    %v299 = vsub.f32 %v31, %v298
    %v300 = vand.u32 %v299, 4294901760
    %301 = vmatpush.msra.mxu0 %v300
    %v302 = vand.u32 %v30, 4294901760
    %v303 = vsub.f32 %v30, %v302
    %v304 = vand.u32 %v303, 4294901760
    %305 = vmatpush.msra.mxu0 %v304
    %v306 = vand.u32 %v29, 4294901760
    %v307 = vsub.f32 %v29, %v306
    %v308 = vand.u32 %v307, 4294901760
    %309 = vmatpush.msra.mxu0 %v308
    %v310 = vand.u32 %v28, 4294901760
    %v311 = vsub.f32 %v28, %v310
    %v312 = vand.u32 %v311, 4294901760
    %313 = vmatpush.msra.mxu0 %v312
    %v314 = vand.u32 %v27, 4294901760
    %v315 = vsub.f32 %v27, %v314
    %v316 = vand.u32 %v315, 4294901760
    %317 = vmatpush.msra.mxu0 %v316
    %v318 = vand.u32 %v26, 4294901760
    %v319 = vsub.f32 %v26, %v318
    %v320 = vand.u32 %v319, 4294901760
    %321 = vmatpush.msra.mxu0 %v320
    %v322 = vand.u32 %v25, 4294901760
    %v323 = vsub.f32 %v25, %v322
    %v324 = vand.u32 %v323, 4294901760
    %325 = vmatpush.msra.mxu0 %v324
    %v326 = vand.u32 %v24, 4294901760
    %v327 = vsub.f32 %v24, %v326
    %v328 = vand.u32 %v327, 4294901760
    %329 = vmatpush.msra.mxu0 %v328
    %v330 = vand.u32 %v23, 4294901760
    %v331 = vsub.f32 %v23, %v330
    %v332 = vand.u32 %v331, 4294901760
    %333 = vmatpush.msra.mxu0 %v332
    %v334 = vand.u32 %v22, 4294901760
    %v335 = vsub.f32 %v22, %v334
    %v336 = vand.u32 %v335, 4294901760
    %337 = vmatpush.msra.mxu0 %v336
    %v338 = vand.u32 %v21, 4294901760
    %339 = vmatmul.f32.gmra.mxu0 %v338
    %v340 = vpop.f32.mrf.mxu0
    %v341 = vadd.f32 %v272, %v340
    %342 = vdwg.mxu0
    %v343 = vand.u32 %v37, 4294901760
    %344 = vmatpush.msra.mxu0 %v343
    %v345 = vand.u32 %v36, 4294901760
    %346 = vmatpush.msra.mxu0 %v345
    %v347 = vand.u32 %v35, 4294901760
    %348 = vmatpush.msra.mxu0 %v347
    %v349 = vand.u32 %v34, 4294901760
    %350 = vmatpush.msra.mxu0 %v349
    %v351 = vand.u32 %v33, 4294901760
    %352 = vmatpush.msra.mxu0 %v351
    %v353 = vand.u32 %v32, 4294901760
    %354 = vmatpush.msra.mxu0 %v353
    %v355 = vand.u32 %v31, 4294901760
    %356 = vmatpush.msra.mxu0 %v355
    %v357 = vand.u32 %v30, 4294901760
    %358 = vmatpush.msra.mxu0 %v357
    %v359 = vand.u32 %v29, 4294901760
    %360 = vmatpush.msra.mxu0 %v359
    %v361 = vand.u32 %v28, 4294901760
    %362 = vmatpush.msra.mxu0 %v361
    %v363 = vand.u32 %v27, 4294901760
    %364 = vmatpush.msra.mxu0 %v363
    %v365 = vand.u32 %v26, 4294901760
    %366 = vmatpush.msra.mxu0 %v365
    %v367 = vand.u32 %v25, 4294901760
    %368 = vmatpush.msra.mxu0 %v367
    %v369 = vand.u32 %v24, 4294901760
    %370 = vmatpush.msra.mxu0 %v369
    %v371 = vand.u32 %v23, 4294901760
    %372 = vmatpush.msra.mxu0 %v371
    %v373 = vand.u32 %v22, 4294901760
    %374 = vmatpush.msra.mxu0 %v373
    %v375 = vand.u32 %v21, 4294901760
    %376 = vmatmul.f32.gmra.mxu0 %v375
    %v377 = vpop.f32.mrf.mxu0
    %v378 = vadd.f32 %v341, %v377
    %379 = vdwg.mxu0
    %v380 = vmul.f32 %v378, 0.03125
    %vm381 = vcmask 31744
    %v383 = vsel %vm381, %v380, 0
    %vm385 = vcmask 1043456
    %v387 = vsel %vm385, %v38, 0
    %389 = vmatpush.msra.mxu0 0.0
    %390 = vmatpush.msra.mxu0 0.0
    %391 = vmatpush.msra.mxu0 0.0
    %392 = vmatpush.msra.mxu0 0.0
    %393 = vmatpush.msra.mxu0 0.0
    %394 = vmatpush.msra.mxu0 0.0
    %395 = vmatpush.msra.mxu0 0.0
    %396 = vmatpush.msra.mxu0 0.0
    %397 = vmatpush.msra.mxu0 0.0
    %398 = vmatpush.msra.mxu0 0.0
    %399 = vmatpush.msra.mxu0 0.0
    %400 = vmatpush.msra.mxu0 0.0
    %401 = vmatpush.msra.mxu0 0.0
    %402 = vmatpush.msra.mxu0 0.0
    %403 = vmatpush.msra.mxu0 0.0
    %v404 = vand.u32 %v387, 4294901760
    %405 = vmatpush.msra.mxu0 %v404
    %v406 = vand.u32 %v383, 4294901760
    %v407 = vsub.f32 %v383, %v406
    %v408 = vand.u32 %v407, 4294901760
    %v409 = vsub.f32 %v407, %v408
    %v410 = vand.u32 %v409, 4294901760
    %411 = vmatmul.f32.gmra.mxu0 %v410
    %v412 = vpop.f32.mrf.mxu0
    %v413 = vadd.f32 0.0, %v412
    %414 = vdwg.mxu0
    %415 = vmatpush.msra.mxu0 0.0
    %416 = vmatpush.msra.mxu0 0.0
    %417 = vmatpush.msra.mxu0 0.0
    %418 = vmatpush.msra.mxu0 0.0
    %419 = vmatpush.msra.mxu0 0.0
    %420 = vmatpush.msra.mxu0 0.0
    %421 = vmatpush.msra.mxu0 0.0
    %422 = vmatpush.msra.mxu0 0.0
    %423 = vmatpush.msra.mxu0 0.0
    %424 = vmatpush.msra.mxu0 0.0
    %425 = vmatpush.msra.mxu0 0.0
    %426 = vmatpush.msra.mxu0 0.0
    %427 = vmatpush.msra.mxu0 0.0
    %428 = vmatpush.msra.mxu0 0.0
    %429 = vmatpush.msra.mxu0 0.0
    %v430 = vand.u32 %v387, 4294901760
    %v431 = vsub.f32 %v387, %v430
    %v432 = vand.u32 %v431, 4294901760
    %v433 = vsub.f32 %v431, %v432
    %v434 = vand.u32 %v433, 4294901760
    %435 = vmatpush.msra.mxu0 %v434
    %v436 = vand.u32 %v383, 4294901760
    %437 = vmatmul.f32.gmra.mxu0 %v436
    %v438 = vpop.f32.mrf.mxu0
    %v439 = vadd.f32 %v413, %v438
    %440 = vdwg.mxu0
    %441 = vmatpush.msra.mxu0 0.0
    %442 = vmatpush.msra.mxu0 0.0
    %443 = vmatpush.msra.mxu0 0.0
    %444 = vmatpush.msra.mxu0 0.0
    %445 = vmatpush.msra.mxu0 0.0
    %446 = vmatpush.msra.mxu0 0.0
    %447 = vmatpush.msra.mxu0 0.0
    %448 = vmatpush.msra.mxu0 0.0
    %449 = vmatpush.msra.mxu0 0.0
    %450 = vmatpush.msra.mxu0 0.0
    %451 = vmatpush.msra.mxu0 0.0
    %452 = vmatpush.msra.mxu0 0.0
    %453 = vmatpush.msra.mxu0 0.0
    %454 = vmatpush.msra.mxu0 0.0
    %455 = vmatpush.msra.mxu0 0.0
    %v456 = vand.u32 %v387, 4294901760
    %v457 = vsub.f32 %v387, %v456
    %458 = vmatpush.msra.mxu0 %v457
    %v459 = vand.u32 %v383, 4294901760
    %v460 = vsub.f32 %v383, %v459
    %461 = vmatmul.f32.gmra.mxu0 %v460
    %v462 = vpop.f32.mrf.mxu0
    %v463 = vadd.f32 %v439, %v462
    %464 = vdwg.mxu0
    %465 = vmatpush.msra.mxu0 0.0
    %466 = vmatpush.msra.mxu0 0.0
    %467 = vmatpush.msra.mxu0 0.0
    %468 = vmatpush.msra.mxu0 0.0
    %469 = vmatpush.msra.mxu0 0.0
    %470 = vmatpush.msra.mxu0 0.0
    %471 = vmatpush.msra.mxu0 0.0
    %472 = vmatpush.msra.mxu0 0.0
    %473 = vmatpush.msra.mxu0 0.0
    %474 = vmatpush.msra.mxu0 0.0
    %475 = vmatpush.msra.mxu0 0.0
    %476 = vmatpush.msra.mxu0 0.0
    %477 = vmatpush.msra.mxu0 0.0
    %478 = vmatpush.msra.mxu0 0.0
    %479 = vmatpush.msra.mxu0 0.0
    %v480 = vand.u32 %v387, 4294901760
    %481 = vmatpush.msra.mxu0 %v480
    %v482 = vand.u32 %v383, 4294901760
    %v483 = vsub.f32 %v383, %v482
    %v484 = vand.u32 %v483, 4294901760
    %485 = vmatmul.f32.gmra.mxu0 %v484
    %v486 = vpop.f32.mrf.mxu0
    %v487 = vadd.f32 %v463, %v486
    %488 = vdwg.mxu0
    %489 = vmatpush.msra.mxu0 0.0
    %490 = vmatpush.msra.mxu0 0.0
    %491 = vmatpush.msra.mxu0 0.0
    %492 = vmatpush.msra.mxu0 0.0
    %493 = vmatpush.msra.mxu0 0.0
    %494 = vmatpush.msra.mxu0 0.0
    %495 = vmatpush.msra.mxu0 0.0
    %496 = vmatpush.msra.mxu0 0.0
    %497 = vmatpush.msra.mxu0 0.0
    %498 = vmatpush.msra.mxu0 0.0
    %499 = vmatpush.msra.mxu0 0.0
    %500 = vmatpush.msra.mxu0 0.0
    %501 = vmatpush.msra.mxu0 0.0
    %502 = vmatpush.msra.mxu0 0.0
    %503 = vmatpush.msra.mxu0 0.0
    %v504 = vand.u32 %v387, 4294901760
    %v505 = vsub.f32 %v387, %v504
    %v506 = vand.u32 %v505, 4294901760
    %507 = vmatpush.msra.mxu0 %v506
    %v508 = vand.u32 %v383, 4294901760
    %509 = vmatmul.f32.gmra.mxu0 %v508
    %v510 = vpop.f32.mrf.mxu0
    %v511 = vadd.f32 %v487, %v510
    %512 = vdwg.mxu0
    %513 = vmatpush.msra.mxu0 0.0
    %514 = vmatpush.msra.mxu0 0.0
    %515 = vmatpush.msra.mxu0 0.0
    %516 = vmatpush.msra.mxu0 0.0
    %517 = vmatpush.msra.mxu0 0.0
    %518 = vmatpush.msra.mxu0 0.0
    %519 = vmatpush.msra.mxu0 0.0
    %520 = vmatpush.msra.mxu0 0.0
    %521 = vmatpush.msra.mxu0 0.0
    %522 = vmatpush.msra.mxu0 0.0
    %523 = vmatpush.msra.mxu0 0.0
    %524 = vmatpush.msra.mxu0 0.0
    %525 = vmatpush.msra.mxu0 0.0
    %526 = vmatpush.msra.mxu0 0.0
    %527 = vmatpush.msra.mxu0 0.0
    %v528 = vand.u32 %v387, 4294901760
    %529 = vmatpush.msra.mxu0 %v528
    %v530 = vand.u32 %v383, 4294901760
    %531 = vmatmul.f32.gmra.mxu0 %v530
    %v532 = vpop.f32.mrf.mxu0
    %v533 = vadd.f32 %v511, %v532
    %534 = vdwg.mxu0
    %v535 = vsub.f32 %v21, %v533
    %v536 = vmul.f32 %v535, %v535
    %v537 = vand.u32 %v37, 4294901760
    %538 = vmatpush.msra.mxu0 %v537
    %v539 = vand.u32 %v36, 4294901760
    %540 = vmatpush.msra.mxu0 %v539
    %v541 = vand.u32 %v35, 4294901760
    %542 = vmatpush.msra.mxu0 %v541
    %v543 = vand.u32 %v34, 4294901760
    %544 = vmatpush.msra.mxu0 %v543
    %v545 = vand.u32 %v33, 4294901760
    %546 = vmatpush.msra.mxu0 %v545
    %v547 = vand.u32 %v32, 4294901760
    %548 = vmatpush.msra.mxu0 %v547
    %v549 = vand.u32 %v31, 4294901760
    %550 = vmatpush.msra.mxu0 %v549
    %v551 = vand.u32 %v30, 4294901760
    %552 = vmatpush.msra.mxu0 %v551
    %v553 = vand.u32 %v29, 4294901760
    %554 = vmatpush.msra.mxu0 %v553
    %v555 = vand.u32 %v28, 4294901760
    %556 = vmatpush.msra.mxu0 %v555
    %v557 = vand.u32 %v27, 4294901760
    %558 = vmatpush.msra.mxu0 %v557
    %v559 = vand.u32 %v26, 4294901760
    %560 = vmatpush.msra.mxu0 %v559
    %v561 = vand.u32 %v25, 4294901760
    %562 = vmatpush.msra.mxu0 %v561
    %v563 = vand.u32 %v24, 4294901760
    %564 = vmatpush.msra.mxu0 %v563
    %v565 = vand.u32 %v23, 4294901760
    %566 = vmatpush.msra.mxu0 %v565
    %v567 = vand.u32 %v22, 4294901760
    %568 = vmatpush.msra.mxu0 %v567
    %v569 = vand.u32 %v536, 4294901760
    %v570 = vsub.f32 %v536, %v569
    %v571 = vand.u32 %v570, 4294901760
    %v572 = vsub.f32 %v570, %v571
    %v573 = vand.u32 %v572, 4294901760
    %574 = vmatmul.f32.gmra.mxu0 %v573
    %v575 = vpop.f32.mrf.mxu0
    %v576 = vadd.f32 0.0, %v575
    %577 = vdwg.mxu0
    %v578 = vand.u32 %v37, 4294901760
    %v579 = vsub.f32 %v37, %v578
    %v580 = vand.u32 %v579, 4294901760
    %v581 = vsub.f32 %v579, %v580
    %v582 = vand.u32 %v581, 4294901760
    %583 = vmatpush.msra.mxu0 %v582
    %v584 = vand.u32 %v36, 4294901760
    %v585 = vsub.f32 %v36, %v584
    %v586 = vand.u32 %v585, 4294901760
    %v587 = vsub.f32 %v585, %v586
    %v588 = vand.u32 %v587, 4294901760
    %589 = vmatpush.msra.mxu0 %v588
    %v590 = vand.u32 %v35, 4294901760
    %v591 = vsub.f32 %v35, %v590
    %v592 = vand.u32 %v591, 4294901760
    %v593 = vsub.f32 %v591, %v592
    %v594 = vand.u32 %v593, 4294901760
    %595 = vmatpush.msra.mxu0 %v594
    %v596 = vand.u32 %v34, 4294901760
    %v597 = vsub.f32 %v34, %v596
    %v598 = vand.u32 %v597, 4294901760
    %v599 = vsub.f32 %v597, %v598
    %v600 = vand.u32 %v599, 4294901760
    %601 = vmatpush.msra.mxu0 %v600
    %v602 = vand.u32 %v33, 4294901760
    %v603 = vsub.f32 %v33, %v602
    %v604 = vand.u32 %v603, 4294901760
    %v605 = vsub.f32 %v603, %v604
    %v606 = vand.u32 %v605, 4294901760
    %607 = vmatpush.msra.mxu0 %v606
    %v608 = vand.u32 %v32, 4294901760
    %v609 = vsub.f32 %v32, %v608
    %v610 = vand.u32 %v609, 4294901760
    %v611 = vsub.f32 %v609, %v610
    %v612 = vand.u32 %v611, 4294901760
    %613 = vmatpush.msra.mxu0 %v612
    %v614 = vand.u32 %v31, 4294901760
    %v615 = vsub.f32 %v31, %v614
    %v616 = vand.u32 %v615, 4294901760
    %v617 = vsub.f32 %v615, %v616
    %v618 = vand.u32 %v617, 4294901760
    %619 = vmatpush.msra.mxu0 %v618
    %v620 = vand.u32 %v30, 4294901760
    %v621 = vsub.f32 %v30, %v620
    %v622 = vand.u32 %v621, 4294901760
    %v623 = vsub.f32 %v621, %v622
    %v624 = vand.u32 %v623, 4294901760
    %625 = vmatpush.msra.mxu0 %v624
    %v626 = vand.u32 %v29, 4294901760
    %v627 = vsub.f32 %v29, %v626
    %v628 = vand.u32 %v627, 4294901760
    %v629 = vsub.f32 %v627, %v628
    %v630 = vand.u32 %v629, 4294901760
    %631 = vmatpush.msra.mxu0 %v630
    %v632 = vand.u32 %v28, 4294901760
    %v633 = vsub.f32 %v28, %v632
    %v634 = vand.u32 %v633, 4294901760
    %v635 = vsub.f32 %v633, %v634
    %v636 = vand.u32 %v635, 4294901760
    %637 = vmatpush.msra.mxu0 %v636
    %v638 = vand.u32 %v27, 4294901760
    %v639 = vsub.f32 %v27, %v638
    %v640 = vand.u32 %v639, 4294901760
    %v641 = vsub.f32 %v639, %v640
    %v642 = vand.u32 %v641, 4294901760
    %643 = vmatpush.msra.mxu0 %v642
    %v644 = vand.u32 %v26, 4294901760
    %v645 = vsub.f32 %v26, %v644
    %v646 = vand.u32 %v645, 4294901760
    %v647 = vsub.f32 %v645, %v646
    %v648 = vand.u32 %v647, 4294901760
    %649 = vmatpush.msra.mxu0 %v648
    %v650 = vand.u32 %v25, 4294901760
    %v651 = vsub.f32 %v25, %v650
    %v652 = vand.u32 %v651, 4294901760
    %v653 = vsub.f32 %v651, %v652
    %v654 = vand.u32 %v653, 4294901760
    %655 = vmatpush.msra.mxu0 %v654
    %v656 = vand.u32 %v24, 4294901760
    %v657 = vsub.f32 %v24, %v656
    %v658 = vand.u32 %v657, 4294901760
    %v659 = vsub.f32 %v657, %v658
    %v660 = vand.u32 %v659, 4294901760
    %661 = vmatpush.msra.mxu0 %v660
    %v662 = vand.u32 %v23, 4294901760
    %v663 = vsub.f32 %v23, %v662
    %v664 = vand.u32 %v663, 4294901760
    %v665 = vsub.f32 %v663, %v664
    %v666 = vand.u32 %v665, 4294901760
    %667 = vmatpush.msra.mxu0 %v666
    %v668 = vand.u32 %v22, 4294901760
    %v669 = vsub.f32 %v22, %v668
    %v670 = vand.u32 %v669, 4294901760
    %v671 = vsub.f32 %v669, %v670
    %v672 = vand.u32 %v671, 4294901760
    %673 = vmatpush.msra.mxu0 %v672
    %v674 = vand.u32 %v536, 4294901760
    %675 = vmatmul.f32.gmra.mxu0 %v674
    %v676 = vpop.f32.mrf.mxu0
    %v677 = vadd.f32 %v576, %v676
    %678 = vdwg.mxu0
    %v679 = vand.u32 %v37, 4294901760
    %v680 = vsub.f32 %v37, %v679
    %681 = vmatpush.msra.mxu0 %v680
    %v682 = vand.u32 %v36, 4294901760
    %v683 = vsub.f32 %v36, %v682
    %684 = vmatpush.msra.mxu0 %v683
    %v685 = vand.u32 %v35, 4294901760
    %v686 = vsub.f32 %v35, %v685
    %687 = vmatpush.msra.mxu0 %v686
    %v688 = vand.u32 %v34, 4294901760
    %v689 = vsub.f32 %v34, %v688
    %690 = vmatpush.msra.mxu0 %v689
    %v691 = vand.u32 %v33, 4294901760
    %v692 = vsub.f32 %v33, %v691
    %693 = vmatpush.msra.mxu0 %v692
    %v694 = vand.u32 %v32, 4294901760
    %v695 = vsub.f32 %v32, %v694
    %696 = vmatpush.msra.mxu0 %v695
    %v697 = vand.u32 %v31, 4294901760
    %v698 = vsub.f32 %v31, %v697
    %699 = vmatpush.msra.mxu0 %v698
    %v700 = vand.u32 %v30, 4294901760
    %v701 = vsub.f32 %v30, %v700
    %702 = vmatpush.msra.mxu0 %v701
    %v703 = vand.u32 %v29, 4294901760
    %v704 = vsub.f32 %v29, %v703
    %705 = vmatpush.msra.mxu0 %v704
    %v706 = vand.u32 %v28, 4294901760
    %v707 = vsub.f32 %v28, %v706
    %708 = vmatpush.msra.mxu0 %v707
    %v709 = vand.u32 %v27, 4294901760
    %v710 = vsub.f32 %v27, %v709
    %711 = vmatpush.msra.mxu0 %v710
    %v712 = vand.u32 %v26, 4294901760
    %v713 = vsub.f32 %v26, %v712
    %714 = vmatpush.msra.mxu0 %v713
    %v715 = vand.u32 %v25, 4294901760
    %v716 = vsub.f32 %v25, %v715
    %717 = vmatpush.msra.mxu0 %v716
    %v718 = vand.u32 %v24, 4294901760
    %v719 = vsub.f32 %v24, %v718
    %720 = vmatpush.msra.mxu0 %v719
    %v721 = vand.u32 %v23, 4294901760
    %v722 = vsub.f32 %v23, %v721
    %723 = vmatpush.msra.mxu0 %v722
    %v724 = vand.u32 %v22, 4294901760
    %v725 = vsub.f32 %v22, %v724
    %726 = vmatpush.msra.mxu0 %v725
    %v727 = vand.u32 %v536, 4294901760
    %v728 = vsub.f32 %v536, %v727
    %729 = vmatmul.f32.gmra.mxu0 %v728
    %v730 = vpop.f32.mrf.mxu0
    %v731 = vadd.f32 %v677, %v730
    %732 = vdwg.mxu0
    %v733 = vand.u32 %v37, 4294901760
    %734 = vmatpush.msra.mxu0 %v733
    %v735 = vand.u32 %v36, 4294901760
    %736 = vmatpush.msra.mxu0 %v735
    %v737 = vand.u32 %v35, 4294901760
    %738 = vmatpush.msra.mxu0 %v737
    %v739 = vand.u32 %v34, 4294901760
    %740 = vmatpush.msra.mxu0 %v739
    %v741 = vand.u32 %v33, 4294901760
    %742 = vmatpush.msra.mxu0 %v741
    %v743 = vand.u32 %v32, 4294901760
    %744 = vmatpush.msra.mxu0 %v743
    %v745 = vand.u32 %v31, 4294901760
    %746 = vmatpush.msra.mxu0 %v745
    %v747 = vand.u32 %v30, 4294901760
    %748 = vmatpush.msra.mxu0 %v747
    %v749 = vand.u32 %v29, 4294901760
    %750 = vmatpush.msra.mxu0 %v749
    %v751 = vand.u32 %v28, 4294901760
    %752 = vmatpush.msra.mxu0 %v751
    %v753 = vand.u32 %v27, 4294901760
    %754 = vmatpush.msra.mxu0 %v753
    %v755 = vand.u32 %v26, 4294901760
    %756 = vmatpush.msra.mxu0 %v755
    %v757 = vand.u32 %v25, 4294901760
    %758 = vmatpush.msra.mxu0 %v757
    %v759 = vand.u32 %v24, 4294901760
    %760 = vmatpush.msra.mxu0 %v759
    %v761 = vand.u32 %v23, 4294901760
    %762 = vmatpush.msra.mxu0 %v761
    %v763 = vand.u32 %v22, 4294901760
    %764 = vmatpush.msra.mxu0 %v763
    %v765 = vand.u32 %v536, 4294901760
    %v766 = vsub.f32 %v536, %v765
    %v767 = vand.u32 %v766, 4294901760
    %768 = vmatmul.f32.gmra.mxu0 %v767
    %v769 = vpop.f32.mrf.mxu0
    %v770 = vadd.f32 %v731, %v769
    %771 = vdwg.mxu0
    %v772 = vand.u32 %v37, 4294901760
    %v773 = vsub.f32 %v37, %v772
    %v774 = vand.u32 %v773, 4294901760
    %775 = vmatpush.msra.mxu0 %v774
    %v776 = vand.u32 %v36, 4294901760
    %v777 = vsub.f32 %v36, %v776
    %v778 = vand.u32 %v777, 4294901760
    %779 = vmatpush.msra.mxu0 %v778
    %v780 = vand.u32 %v35, 4294901760
    %v781 = vsub.f32 %v35, %v780
    %v782 = vand.u32 %v781, 4294901760
    %783 = vmatpush.msra.mxu0 %v782
    %v784 = vand.u32 %v34, 4294901760
    %v785 = vsub.f32 %v34, %v784
    %v786 = vand.u32 %v785, 4294901760
    %787 = vmatpush.msra.mxu0 %v786
    %v788 = vand.u32 %v33, 4294901760
    %v789 = vsub.f32 %v33, %v788
    %v790 = vand.u32 %v789, 4294901760
    %791 = vmatpush.msra.mxu0 %v790
    %v792 = vand.u32 %v32, 4294901760
    %v793 = vsub.f32 %v32, %v792
    %v794 = vand.u32 %v793, 4294901760
    %795 = vmatpush.msra.mxu0 %v794
    %v796 = vand.u32 %v31, 4294901760
    %v797 = vsub.f32 %v31, %v796
    %v798 = vand.u32 %v797, 4294901760
    %799 = vmatpush.msra.mxu0 %v798
    %v800 = vand.u32 %v30, 4294901760
    %v801 = vsub.f32 %v30, %v800
    %v802 = vand.u32 %v801, 4294901760
    %803 = vmatpush.msra.mxu0 %v802
    %v804 = vand.u32 %v29, 4294901760
    %v805 = vsub.f32 %v29, %v804
    %v806 = vand.u32 %v805, 4294901760
    %807 = vmatpush.msra.mxu0 %v806
    %v808 = vand.u32 %v28, 4294901760
    %v809 = vsub.f32 %v28, %v808
    %v810 = vand.u32 %v809, 4294901760
    %811 = vmatpush.msra.mxu0 %v810
    %v812 = vand.u32 %v27, 4294901760
    %v813 = vsub.f32 %v27, %v812
    %v814 = vand.u32 %v813, 4294901760
    %815 = vmatpush.msra.mxu0 %v814
    %v816 = vand.u32 %v26, 4294901760
    %v817 = vsub.f32 %v26, %v816
    %v818 = vand.u32 %v817, 4294901760
    %819 = vmatpush.msra.mxu0 %v818
    %v820 = vand.u32 %v25, 4294901760
    %v821 = vsub.f32 %v25, %v820
    %v822 = vand.u32 %v821, 4294901760
    %823 = vmatpush.msra.mxu0 %v822
    %v824 = vand.u32 %v24, 4294901760
    %v825 = vsub.f32 %v24, %v824
    %v826 = vand.u32 %v825, 4294901760
    %827 = vmatpush.msra.mxu0 %v826
    %v828 = vand.u32 %v23, 4294901760
    %v829 = vsub.f32 %v23, %v828
    %v830 = vand.u32 %v829, 4294901760
    %831 = vmatpush.msra.mxu0 %v830
    %v832 = vand.u32 %v22, 4294901760
    %v833 = vsub.f32 %v22, %v832
    %v834 = vand.u32 %v833, 4294901760
    %835 = vmatpush.msra.mxu0 %v834
    %v836 = vand.u32 %v536, 4294901760
    %837 = vmatmul.f32.gmra.mxu0 %v836
    %v838 = vpop.f32.mrf.mxu0
    %v839 = vadd.f32 %v770, %v838
    %840 = vdwg.mxu0
    %v841 = vand.u32 %v37, 4294901760
    %842 = vmatpush.msra.mxu0 %v841
    %v843 = vand.u32 %v36, 4294901760
    %844 = vmatpush.msra.mxu0 %v843
    %v845 = vand.u32 %v35, 4294901760
    %846 = vmatpush.msra.mxu0 %v845
    %v847 = vand.u32 %v34, 4294901760
    %848 = vmatpush.msra.mxu0 %v847
    %v849 = vand.u32 %v33, 4294901760
    %850 = vmatpush.msra.mxu0 %v849
    %v851 = vand.u32 %v32, 4294901760
    %852 = vmatpush.msra.mxu0 %v851
    %v853 = vand.u32 %v31, 4294901760
    %854 = vmatpush.msra.mxu0 %v853
    %v855 = vand.u32 %v30, 4294901760
    %856 = vmatpush.msra.mxu0 %v855
    %v857 = vand.u32 %v29, 4294901760
    %858 = vmatpush.msra.mxu0 %v857
    %v859 = vand.u32 %v28, 4294901760
    %860 = vmatpush.msra.mxu0 %v859
    %v861 = vand.u32 %v27, 4294901760
    %862 = vmatpush.msra.mxu0 %v861
    %v863 = vand.u32 %v26, 4294901760
    %864 = vmatpush.msra.mxu0 %v863
    %v865 = vand.u32 %v25, 4294901760
    %866 = vmatpush.msra.mxu0 %v865
    %v867 = vand.u32 %v24, 4294901760
    %868 = vmatpush.msra.mxu0 %v867
    %v869 = vand.u32 %v23, 4294901760
    %870 = vmatpush.msra.mxu0 %v869
    %v871 = vand.u32 %v22, 4294901760
    %872 = vmatpush.msra.mxu0 %v871
    %v873 = vand.u32 %v536, 4294901760
    %874 = vmatmul.f32.gmra.mxu0 %v873
    %v875 = vpop.f32.mrf.mxu0
    %v876 = vadd.f32 %v839, %v875
    %877 = vdwg.mxu0
    %v878 = vmul.f32 %v876, 0.032258064
    %v879 = vmax.f32 %v878, 0.0
    %v880 = vrsqrt.pop %v879
    %v881 = vmul.f32 %v880, %v879
    %v882 = vmul.f32 %v881, %v880
    %v883 = vmul.f32 0.5, %v882
    %v884 = vsub.f32 1.5, %v883
    %v885 = vmul.f32 %v880, %v884
    %v886 = vmul.f32 %v879, %v885
    %vm887 = vcmp.eq.f32.partialorder %v879, inf
    %v888 = vsel %vm887, %v879, %v886
    %vm889 = vcmp.eq.f32.partialorder %v879, 0.0
    %v890 = vand.u32 %v879, 2147483648
    %v891 = vsel %vm889, %v890, %v888
    %v892 = vadd.f32 %v891, 1e-06
    %v893 = vrcp.pop %v892
    %v894 = vmul.f32 %v892, %v893
    %v895 = vsub.f32 2.0, %v894
    %v896 = vmul.f32 %v893, %v895
    %v898 = vsel %vm381, %v896, 0
    %900 = vmatpush.msra.mxu0 0.0
    %901 = vmatpush.msra.mxu0 0.0
    %902 = vmatpush.msra.mxu0 0.0
    %903 = vmatpush.msra.mxu0 0.0
    %904 = vmatpush.msra.mxu0 0.0
    %905 = vmatpush.msra.mxu0 0.0
    %906 = vmatpush.msra.mxu0 0.0
    %907 = vmatpush.msra.mxu0 0.0
    %908 = vmatpush.msra.mxu0 0.0
    %909 = vmatpush.msra.mxu0 0.0
    %910 = vmatpush.msra.mxu0 0.0
    %911 = vmatpush.msra.mxu0 0.0
    %912 = vmatpush.msra.mxu0 0.0
    %913 = vmatpush.msra.mxu0 0.0
    %914 = vmatpush.msra.mxu0 0.0
    %v915 = vand.u32 %v387, 4294901760
    %916 = vmatpush.msra.mxu0 %v915
    %v917 = vand.u32 %v898, 4294901760
    %v918 = vsub.f32 %v898, %v917
    %v919 = vand.u32 %v918, 4294901760
    %v920 = vsub.f32 %v918, %v919
    %v921 = vand.u32 %v920, 4294901760
    %922 = vmatmul.f32.gmra.mxu0 %v921
    %v923 = vpop.f32.mrf.mxu0
    %v924 = vadd.f32 0.0, %v923
    %925 = vdwg.mxu0
    %926 = vmatpush.msra.mxu0 0.0
    %927 = vmatpush.msra.mxu0 0.0
    %928 = vmatpush.msra.mxu0 0.0
    %929 = vmatpush.msra.mxu0 0.0
    %930 = vmatpush.msra.mxu0 0.0
    %931 = vmatpush.msra.mxu0 0.0
    %932 = vmatpush.msra.mxu0 0.0
    %933 = vmatpush.msra.mxu0 0.0
    %934 = vmatpush.msra.mxu0 0.0
    %935 = vmatpush.msra.mxu0 0.0
    %936 = vmatpush.msra.mxu0 0.0
    %937 = vmatpush.msra.mxu0 0.0
    %938 = vmatpush.msra.mxu0 0.0
    %939 = vmatpush.msra.mxu0 0.0
    %940 = vmatpush.msra.mxu0 0.0
    %v941 = vand.u32 %v387, 4294901760
    %v942 = vsub.f32 %v387, %v941
    %v943 = vand.u32 %v942, 4294901760
    %v944 = vsub.f32 %v942, %v943
    %v945 = vand.u32 %v944, 4294901760
    %946 = vmatpush.msra.mxu0 %v945
    %v947 = vand.u32 %v898, 4294901760
    %948 = vmatmul.f32.gmra.mxu0 %v947
    %v949 = vpop.f32.mrf.mxu0
    %v950 = vadd.f32 %v924, %v949
    %951 = vdwg.mxu0
    %952 = vmatpush.msra.mxu0 0.0
    %953 = vmatpush.msra.mxu0 0.0
    %954 = vmatpush.msra.mxu0 0.0
    %955 = vmatpush.msra.mxu0 0.0
    %956 = vmatpush.msra.mxu0 0.0
    %957 = vmatpush.msra.mxu0 0.0
    %958 = vmatpush.msra.mxu0 0.0
    %959 = vmatpush.msra.mxu0 0.0
    %960 = vmatpush.msra.mxu0 0.0
    %961 = vmatpush.msra.mxu0 0.0
    %962 = vmatpush.msra.mxu0 0.0
    %963 = vmatpush.msra.mxu0 0.0
    %964 = vmatpush.msra.mxu0 0.0
    %965 = vmatpush.msra.mxu0 0.0
    %966 = vmatpush.msra.mxu0 0.0
    %v967 = vand.u32 %v387, 4294901760
    %v968 = vsub.f32 %v387, %v967
    %969 = vmatpush.msra.mxu0 %v968
    %v970 = vand.u32 %v898, 4294901760
    %v971 = vsub.f32 %v898, %v970
    %972 = vmatmul.f32.gmra.mxu0 %v971
    %v973 = vpop.f32.mrf.mxu0
    %v974 = vadd.f32 %v950, %v973
    %975 = vdwg.mxu0
    %976 = vmatpush.msra.mxu0 0.0
    %977 = vmatpush.msra.mxu0 0.0
    %978 = vmatpush.msra.mxu0 0.0
    %979 = vmatpush.msra.mxu0 0.0
    %980 = vmatpush.msra.mxu0 0.0
    %981 = vmatpush.msra.mxu0 0.0
    %982 = vmatpush.msra.mxu0 0.0
    %983 = vmatpush.msra.mxu0 0.0
    %984 = vmatpush.msra.mxu0 0.0
    %985 = vmatpush.msra.mxu0 0.0
    %986 = vmatpush.msra.mxu0 0.0
    %987 = vmatpush.msra.mxu0 0.0
    %988 = vmatpush.msra.mxu0 0.0
    %989 = vmatpush.msra.mxu0 0.0
    %990 = vmatpush.msra.mxu0 0.0
    %v991 = vand.u32 %v387, 4294901760
    %992 = vmatpush.msra.mxu0 %v991
    %v993 = vand.u32 %v898, 4294901760
    %v994 = vsub.f32 %v898, %v993
    %v995 = vand.u32 %v994, 4294901760
    %996 = vmatmul.f32.gmra.mxu0 %v995
    %v997 = vpop.f32.mrf.mxu0
    %v998 = vadd.f32 %v974, %v997
    %999 = vdwg.mxu0
    %1000 = vmatpush.msra.mxu0 0.0
    %1001 = vmatpush.msra.mxu0 0.0
    %1002 = vmatpush.msra.mxu0 0.0
    %1003 = vmatpush.msra.mxu0 0.0
    %1004 = vmatpush.msra.mxu0 0.0
    %1005 = vmatpush.msra.mxu0 0.0
    %1006 = vmatpush.msra.mxu0 0.0
    %1007 = vmatpush.msra.mxu0 0.0
    %1008 = vmatpush.msra.mxu0 0.0
    %1009 = vmatpush.msra.mxu0 0.0
    %1010 = vmatpush.msra.mxu0 0.0
    %1011 = vmatpush.msra.mxu0 0.0
    %1012 = vmatpush.msra.mxu0 0.0
    %1013 = vmatpush.msra.mxu0 0.0
    %1014 = vmatpush.msra.mxu0 0.0
    %v1015 = vand.u32 %v387, 4294901760
    %v1016 = vsub.f32 %v387, %v1015
    %v1017 = vand.u32 %v1016, 4294901760
    %1018 = vmatpush.msra.mxu0 %v1017
    %v1019 = vand.u32 %v898, 4294901760
    %1020 = vmatmul.f32.gmra.mxu0 %v1019
    %v1021 = vpop.f32.mrf.mxu0
    %v1022 = vadd.f32 %v998, %v1021
    %1023 = vdwg.mxu0
    %1024 = vmatpush.msra.mxu0 0.0
    %1025 = vmatpush.msra.mxu0 0.0
    %1026 = vmatpush.msra.mxu0 0.0
    %1027 = vmatpush.msra.mxu0 0.0
    %1028 = vmatpush.msra.mxu0 0.0
    %1029 = vmatpush.msra.mxu0 0.0
    %1030 = vmatpush.msra.mxu0 0.0
    %1031 = vmatpush.msra.mxu0 0.0
    %1032 = vmatpush.msra.mxu0 0.0
    %1033 = vmatpush.msra.mxu0 0.0
    %1034 = vmatpush.msra.mxu0 0.0
    %1035 = vmatpush.msra.mxu0 0.0
    %1036 = vmatpush.msra.mxu0 0.0
    %1037 = vmatpush.msra.mxu0 0.0
    %1038 = vmatpush.msra.mxu0 0.0
    %v1039 = vand.u32 %v387, 4294901760
    %1040 = vmatpush.msra.mxu0 %v1039
    %v1041 = vand.u32 %v898, 4294901760
    %1042 = vmatmul.f32.gmra.mxu0 %v1041
    %v1043 = vpop.f32.mrf.mxu0
    %v1044 = vadd.f32 %v1022, %v1043
    %1045 = vdwg.mxu0
    %v1046 = vld [vmem:[%s1] sm:$0x1]
    %v1047 = vld [vmem:[%s2] sm:$0x1]
    %v1048 = vmul.f32 %v535, %v1044
    %v1050 = vperm.slane %v1046, 0
    %v1052 = vmul.f32 %v1048, %v1050
    %v1054 = vperm.slane %v1047, 0
    %v1056 = vadd.f32 %v1052, %v1054
    %1057 = vst [vmem:[#allocation2] sm:$0xff] %v1056
    // Predicated region
    $region22: #{tpu_custom_call.1} parent=1 // pred_check
      _
    $region23: #{tpu_custom_call.1} parent=1 // pred_check_branch
      %1059 = sbr.rel (0) target = $region25
    $region24: #{tpu_custom_call.1} parent=1 // pred_region
      %1061 = vsyncadd [#allocation3], 0
      %s1063 = sshll.u32 [#allocation2], 4
      %s1064 = int_to_ptr.vmem [resolvable:$true] %s1063
      %s1065 = sshll.u32 %s5, 4
      %s1066 = int_to_ptr.hbm [resolvable:$true] %s1065
      %1068 = dma.vmem_to_hbm [thread:$0]  %s1064, 128, %s1066, [#allocation3]
    $region25: #{tpu_custom_call.1} parent=1 // pred_fallthru
      _
    // Predicated region
    $region26: #{tpu_custom_call.1} parent=1 // pred_check
      _
    $region27: #{tpu_custom_call.1} parent=1 // pred_check_branch
      %1070 = sbr.rel (0) target = $region29
    $region28: #{tpu_custom_call.1} parent=1 // pred_region
      %1072 = dma.done [#allocation3], 128
    $region29: #{tpu_custom_call.1} parent=1 // pred_fallthru
      _
    %1073 = vsyncpa [#allocation3], 1

</llo_original>
